<compile_context>
chip_gen: v5e
topology: v5e:2x2
jax: 0.10.0
libtpu: 0.0.40
codegen_flags: <defaults>
</compile_context>

<pallas_src>
import math
import functools

import jax
import jax.numpy as jnp
from jax.experimental import pallas as pl
from jax.experimental.pallas import tpu as pltpu


_MAX_BATCH_TILE = 64              # upper bound on graphs per grid step
_VMEM_BUDGET = 12 * 1024 * 1024   # conservative: fits v5e's 16 MiB default scoped VMEM
_VMEM_LIMIT = 32 * 1024 * 1024    # headroom for blocks; <= v7x's 64 MiB physical VMEM


# ----------------------------- Pallas kernels ------------------------------ #

def _gcn_kernel_bias(x_ref, a_ref, w_ref, b_ref, o_ref):
    # (bt*N, bt*N) @ (bt*N, F_in): block-diagonal propagation, one MXU push.
    prop = jnp.dot(a_ref[...], x_ref[...], preferred_element_type=jnp.float32)
    # (bt*N, F_in) @ (F_in, F_out): shared projection, one tall MXU matmul.
    y = jnp.dot(prop.astype(x_ref.dtype), w_ref[...],
                preferred_element_type=jnp.float32)
    y = y + b_ref[...]                      # fused f32 bias epilogue (one broadcast)
    o_ref[...] = y.astype(o_ref.dtype)


def _gcn_kernel_nobias(x_ref, a_ref, w_ref, o_ref):
    prop = jnp.dot(a_ref[...], x_ref[...], preferred_element_type=jnp.float32)
    y = jnp.dot(prop.astype(x_ref.dtype), w_ref[...],
                preferred_element_type=jnp.float32)
    o_ref[...] = y.astype(o_ref.dtype)


# ------------------------------- Tiling ------------------------------------ #

def _pick_batch_tile(B, N, F_in, F_out, itemsize,
                     budget_bytes=_VMEM_BUDGET, max_tile=_MAX_BATCH_TILE):
    """Largest bt that (a) divides B, (b) keeps >= 2 grid steps when B >= 2
    (so v7x can shard across both TensorCores), (c) fits the VMEM budget
    including the resident grid-invariant blocks and f32 intermediates."""
    def fits(bt):
        rows = bt * N
        x_blk = 2 * rows * F_in * itemsize     # input chunk, double-buffered
        o_blk = 2 * rows * F_out * itemsize    # output chunk, double-buffered
        a_blk = 2 * rows * rows * itemsize     # block-diag adjacency (counted 2x, conservative)
        w_blk = 2 * F_in * F_out * itemsize    # weight
        b_blk = 2 * F_out * itemsize           # bias
        live = rows * (F_in + F_out) * 4       # f32 intermediates held in-kernel
        return x_blk + o_blk + a_blk + w_blk + b_blk + live <= budget_bytes

    bt = min(B, max_tile)
    if B >= 2:
        bt = min(bt, B // 2)   # keep grid >= 2 (v7x megacore; ~free on v5e/v6e)
    bt = max(bt, 1)
    while bt > 1 and (B % bt != 0 or not fits(bt)):
        bt -= 1
    return bt


# ------------------------------- Wrapper ----------------------------------- #

@functools.partial(jax.jit, static_argnames=("conv_mode", "compute_dtype"))
def graph_convolution(x, weight, adj, bias=None, conv_mode="whole_graph",
                      compute_dtype=None):
    """Pallas implementation of GraphConvolution.forward.

    x:      [B, N, F_in]
    weight: [F_in, F_out]
    adj:    dict with 'adj_all' (whole_graph) or 'adj_O_P'/'adj_O_M' (dual_graph)
    bias:   optional [1, 1, F_out]
    compute_dtype: optional reduced-precision operand dtype (e.g. jnp.bfloat16)
    """
    B, N, F_in = x.shape
    F_out = weight.shape[1]

    # Fold the adjacency (dual_graph fold is exact by distributivity).
    if conv_mode == "whole_graph":
        a = adj["adj_all"]
    elif conv_mode == "dual_graph":
        a = 0.5 * (adj["adj_O_P"] + adj["adj_O_M"])
    else:
        raise ValueError(f"unknown conv_mode: {conv_mode}")

    # Sublane alignment: pad the node dim to a multiple of 8 if needed
    # (zero rows/cols in A keep the padded outputs zero; sliced off below).
    N_pad = ((N + 7) // 8) * 8
    if N_pad != N:
        x = jnp.pad(x, ((0, 0), (0, N_pad - N), (0, 0)))
        a = jnp.pad(a, ((0, N_pad - N), (0, N_pad - N)))

    # Optional reduced-precision operand path (f32 accumulate, f32 epilogue).
    if compute_dtype is not None:
        cd = jnp.dtype(compute_dtype)
        x = x.astype(cd)
        weight = weight.astype(cd)
        a = a.astype(cd)
    out_dtype = x.dtype

    bias2d = None
    if bias is not None:
        bias2d = bias.reshape(1, F_out).astype(jnp.float32)

    # Collapse batch: (B, N_pad, F_in) -> (B*N_pad, F_in), free contiguous reshape.
    x2d = x.reshape(B * N_pad, F_in)

    bt = _pick_batch_tile(B, N_pad, F_in, F_out, x.dtype.itemsize)
    rows = bt * N_pad
    grid = (B // bt,)

    # Block-diagonal propagation operand: ONE MXU matmul per grid step instead
    # of bt tiny (N, N) matmuls.  Grid-invariant, resident in VMEM.
    a_blk = jnp.kron(jnp.eye(bt, dtype=a.dtype), a) if bt > 1 else a

    in_specs = [
        pl.BlockSpec((rows, F_in), lambda i: (i, 0)),    # x chunk
        pl.BlockSpec((rows, rows), lambda i: (0, 0)),    # A_blk (grid-invariant)
        pl.BlockSpec((F_in, F_out), lambda i: (0, 0)),   # W     (grid-invariant)
    ]
    args = [x2d, a_blk, weight]
    if bias2d is not None:
        in_specs.append(pl.BlockSpec((1, F_out), lambda i: (0, 0)))
        args.append(bias2d)
        kernel = _gcn_kernel_bias
    else:
        kernel = _gcn_kernel_nobias

    out2d = pl.pallas_call(
        kernel,
        out_shape=jax.ShapeDtypeStruct((B * N_pad, F_out), out_dtype),
        grid_spec=pltpu.PrefetchScalarGridSpec(
            num_scalar_prefetch=0,
            grid=grid,
            in_specs=in_specs,
            out_specs=pl.BlockSpec((rows, F_out), lambda i: (i, 0)),
        ),
        compiler_params=pltpu.CompilerParams(
            dimension_semantics=("parallel",),
            vmem_limit_bytes=_VMEM_LIMIT),
    )(*args)

    out = out2d.reshape(B, N_pad, F_out)
    if N_pad != N:
        out = out[:, :N, :]
    return out


# ------------------------------- Main / test -------------------------------- #

if __name__ == "__main__":
    B, N = 2, 16
    in_features, out_features = 32, 32
    dtype = jnp.float32

    key = jax.random.PRNGKey(0)
    k_x, k_w, k_a1, k_a2, k_a3, k_b = jax.random.split(key, 6)

    # Deterministic parameter init mirroring reset_parameters():
    # uniform(-stdv, stdv) with stdv = 1 / sqrt(out_features)
    stdv = 1.0 / math.sqrt(out_features)
    weight = jax.random.uniform(k_w, (in_features, out_features),
                                dtype=dtype, minval=-stdv, maxval=stdv)
    bias = jax.random.uniform(k_b, (1, 1, out_features),
                              dtype=dtype, minval=-stdv, maxval=stdv)

    x = jax.random.normal(k_x, (B, N, in_features), dtype=dtype)
    adj = {
        "adj_O_P": jax.random.normal(k_a1, (N, N), dtype=dtype),
        "adj_O_M": jax.random.normal(k_a2, (N, N), dtype=dtype),
        "adj_all": jax.random.normal(k_a3, (N, N), dtype=dtype),
    }

    # whole_graph mode (module default), no bias (module default bias=False)
    y_whole = graph_convolution(x, weight, adj, bias=None,
                                conv_mode="whole_graph")
    y_whole = jax.block_until_ready(y_whole)

    # dual_graph mode, with bias
    y_dual = graph_convolution(x, weight, adj, bias=bias,
                               conv_mode="dual_graph")
    y_dual = jax.block_until_ready(y_dual)

    # Pure-JAX reference check (matches the PyTorch order of operations).
    support = jnp.einsum("bnf,fo->bno", x, weight)
    ref_whole = jnp.einsum("nm,bmo->bno", adj["adj_all"], support)
    ref_dual = 0.5 * (jnp.einsum("nm,bmo->bno", adj["adj_O_P"], support)
                      + jnp.einsum("nm,bmo->bno", adj["adj_O_M"], support)) + bias

    assert jnp.allclose(y_whole, ref_whole, atol=1e-4, rtol=1e-4)
    assert jnp.allclose(y_dual, ref_dual, atol=1e-4, rtol=1e-4)

    # Opt-in bf16 operand path (halved HBM traffic, native bf16 MXU); loose check.
    y_bf16 = graph_convolution(x, weight, adj, bias=None,
                               conv_mode="whole_graph",
                               compute_dtype=jnp.bfloat16)
    y_bf16 = jax.block_until_ready(y_bf16)
    assert jnp.allclose(y_bf16.astype(jnp.float32), ref_whole, atol=0.2, rtol=0.1)

    print("KERNEL_OK")
</pallas_src>

<mosaic_0001>
module attributes {stable_mosaic.version = 11 : i64} {
  func.func @_gcn_kernel_nobias(%arg0: i32, %arg1: memref<16x32xf32, #tpu.memory_space<vmem>>, %arg2: memref<16x16xf32, #tpu.memory_space<vmem>>, %arg3: memref<32x32xf32, #tpu.memory_space<vmem>>, %arg4: memref<16x32xf32, #tpu.memory_space<vmem>>) attributes {dimension_semantics = [#tpu.dimension_semantics<parallel>], iteration_bounds = array<i64: 2>, scalar_prefetch = 0 : i64, scratch_operands = 0 : i64, tpu.core_type = #tpu.core_type<tc>, window_params = [{transform_indices = @transform_0, window_bounds = array<i64: 16, 32>}, {pipeline_mode = #tpu.pipeline_mode<synchronous>, transform_indices = @transform_1, window_bounds = array<i64: 16, 16>}, {pipeline_mode = #tpu.pipeline_mode<synchronous>, transform_indices = @transform_2, window_bounds = array<i64: 32, 32>}, {transform_indices = @transform_3, window_bounds = array<i64: 16, 32>}]} {
    %c0 = arith.constant 0 : index
    %c0_0 = arith.constant 0 : index
    %0 = vector.load %arg2[%c0, %c0_0] : memref<16x16xf32, #tpu.memory_space<vmem>>, vector<16x16xf32>
    %c0_1 = arith.constant 0 : index
    %c0_2 = arith.constant 0 : index
    %1 = vector.load %arg1[%c0_1, %c0_2] : memref<16x32xf32, #tpu.memory_space<vmem>>, vector<16x32xf32>
    %cst = arith.constant dense<0.000000e+00> : vector<16x32xf32>
    %2 = tpu.matmul %0, %1, %cst {dimension_numbers = #tpu.dot_dimension_numbers<[1], [0], [0], [1], [0, 0, 1, 1], [], []>} : vector<16x16xf32>, vector<16x32xf32>, vector<16x32xf32> -> vector<16x32xf32>
    %c0_3 = arith.constant 0 : index
    %c0_4 = arith.constant 0 : index
    %3 = vector.load %arg3[%c0_3, %c0_4] : memref<32x32xf32, #tpu.memory_space<vmem>>, vector<32x32xf32>
    %cst_5 = arith.constant dense<0.000000e+00> : vector<16x32xf32>
    %4 = tpu.matmul %2, %3, %cst_5 {dimension_numbers = #tpu.dot_dimension_numbers<[1], [0], [0], [1], [0, 0, 1, 1], [], []>} : vector<16x32xf32>, vector<32x32xf32>, vector<16x32xf32> -> vector<16x32xf32>
    %c0_6 = arith.constant 0 : index
    %c0_7 = arith.constant 0 : index
    %5 = vector.load %arg4[%c0_6, %c0_7] : memref<16x32xf32, #tpu.memory_space<vmem>>, vector<16x32xf32>
    tpu.vector_store %arg4[%c0_6, %c0_7], %4 {strides = array<i32>} : memref<16x32xf32, #tpu.memory_space<vmem>>, vector<16x32xf32>,
    return
  }
  func.func @transform_0(%arg0: i32) -> (i32, i32) {
    %c0_i32 = arith.constant 0 : i32
    %c0_i32_0 = arith.constant 0 : i32
    return %arg0, %c0_i32 : i32, i32
  }
  func.func @transform_1(%arg0: i32) -> (i32, i32) {
    %c0_i32 = arith.constant 0 : i32
    %c0_i32_0 = arith.constant 0 : i32
    %c0_i32_1 = arith.constant 0 : i32
    return %c0_i32, %c0_i32_0 : i32, i32
  }
  func.func @transform_2(%arg0: i32) -> (i32, i32) {
    %c0_i32 = arith.constant 0 : i32
    %c0_i32_0 = arith.constant 0 : i32
    %c0_i32_1 = arith.constant 0 : i32
    return %c0_i32, %c0_i32_0 : i32, i32
  }
  func.func @transform_3(%arg0: i32) -> (i32, i32) {
    %c0_i32 = arith.constant 0 : i32
    %c0_i32_0 = arith.constant 0 : i32
    return %arg0, %c0_i32 : i32, i32
  }
}

</mosaic_0001>

<llo_original>
// kernel: graph_convolution.1
$region0: #{graph_convolution.1}
  #allocation0 [shape = 'u32[]', space=smem, size = 0x4, offset = 0x4, fixed_abs, tag = 'smem constant byte address 0x4 - core index']
  #allocation1 [shape = 'u32[72,128]{1,0:T(1,128)}', space=vmem, size = 0x9000, scoped, tag = 'internal scratch']
  %s0 = inlined_call_operand.hbm [shape: f32[32,32], index: 0, kind: input, shape index: {}]
  %s1 = inlined_call_operand.hbm [shape: f32[16,16], index: 1, kind: input, shape index: {}]
  %s2 = inlined_call_operand.hbm [shape: f32[32,32], index: 2, kind: input, shape index: {}]
  %s3 = inlined_call_operand.hbm [shape: f32[32,32], index: 3, kind: output, shape index: {}]
  %s4 = sld [smem:[#allocation0]]
  $region57: #{graph_convolution.1} parent=0
    _
  %s6 = ssub.s32 1, %s4
  %s7 = scalar_select 0, %s6, %s4
  $region1: #{graph_convolution.1} parent=0
    #allocation2 [shape = 'u8[16384]{0}', space=vmem, size = 0x4000, scoped, tag = 'input window, operand 0']
    #allocation3 [shape = 's32[2]{0}', space=sflag, size = 0x8, scoped, tag = 'scoped memory for graph_convolution.1']
    #allocation4 [shape = 's32[2]{0}', space=sflag, size = 0x8, scoped, tag = 'scoped memory for graph_convolution.1']
    #allocation5 [shape = 'u8[8192]{0}', space=vmem, size = 0x2000, scoped, tag = 'input window, operand 1, single buffered']
    #allocation6 [shape = 's32[1]{0}', space=sflag, size = 0x4, scoped, tag = 'scoped memory for graph_convolution.1']
    #allocation7 [shape = 'u8[16384]{0}', space=vmem, size = 0x4000, scoped, tag = 'input window, operand 2, single buffered']
    #allocation8 [shape = 'u8[16384]{0}', space=vmem, size = 0x4000, scoped, tag = 'output window, operand 0']
    %8 = vsyncpa [#allocation3], 0
    %s9 = scalar_lea.sflag [#allocation3], 1
    %10 = vsyncpa %s9, 0
    %11 = vsyncpa [#allocation6], 0
    %12 = vsyncpa [#allocation4], 0
    %s13 = scalar_lea.sflag [#allocation4], 1
    %14 = vsyncpa %s13, 0
    loop: start=0, step=1, limit=4
    $region2: #{graph_convolution.1} parent=1 // loop_pre_header
      _
    $region3: #{graph_convolution.1} parent=1 // loop_header
      %s16 = sphi 0, %s20
      %p17 = scmp.ge.s32.totalorder %s16, 4
      %s26 = sphi 0, %s28
      %s29 = sphi 0, %s26
      %s30 = sphi 0, %s29
      %s46 = sphi 0, %s30
      %s50 = sphi 0, %s50
      %s52 = sphi 0, %s50
      %s53 = sphi 0, %s52
      %s67 = sphi 0, %s53
      %s71 = sphi 0, %s71
      %s73 = sphi 0, %s71
      %s74 = sphi 0, %s73
      %s88 = sphi 0, %s74
      %s94 = sphi 0, %s96
      %s97 = sphi 0, %s94
      %s98 = sphi 0, %s97
      %s114 = sphi 0, %s98
    $region4: #{graph_convolution.1} parent=1 // loop_header_branch
      %19 = sbr.rel (%p17) target = $region8
    $region5: #{graph_convolution.1} parent=1 // loop_body
      %s21 = ssub.s32 %s16, 1
      %s22 = ssub.s32 %s16, 2
      %s23 = sadd.s32 %s16, 1
      %s24 = ssub.s32 %s16, %s23
      %p25 = scmp.eq.s32.totalorder %s24, 0
      %s27 = sadd.s32 %s26, 1
      %s28 = scalar_select %p25, %s26, %s27
      %p31 = pneg %p25
      %p32 = scmp.eq.s32.totalorder %s16, 1
      %p33 = por %p31, %p32
      %p34 = scmp.ne.s32.totalorder %s26, %s29
      %p35 = scmp.eq.s32.totalorder %s16, 0
      %p36 = por %p34, %p35
      %p37 = scmp.ne.s32.totalorder %s26, %s29
      %p38 = scmp.eq.s32.totalorder %s21, 1
      %p39 = por %p37, %p38
      %p40 = scmp.ne.s32.totalorder %s29, %s30
      %p41 = scmp.eq.s32.totalorder %s21, 0
      %p42 = por %p40, %p41
      %p43 = scmp.ne.s32.totalorder %s29, %s30
      %p44 = scmp.eq.s32.totalorder %s22, 1
      %p45 = por %p43, %p44
      %p47 = scmp.ne.s32.totalorder %s30, %s46
      %p48 = scmp.eq.s32.totalorder %s22, 0
      %p49 = por %p47, %p48
      %s51 = sadd.s32 %s50, 1
      %p54 = scmp.eq.s32.totalorder %s16, 1
      %p55 = scmp.ne.s32.totalorder %s50, %s52
      %p56 = scmp.eq.s32.totalorder %s16, 0
      %p57 = por %p55, %p56
      %p58 = scmp.ne.s32.totalorder %s50, %s52
      %p59 = scmp.eq.s32.totalorder %s21, 1
      %p60 = por %p58, %p59
      %p61 = scmp.ne.s32.totalorder %s52, %s53
      %p62 = scmp.eq.s32.totalorder %s21, 0
      %p63 = por %p61, %p62
      %p64 = scmp.ne.s32.totalorder %s52, %s53
      %p65 = scmp.eq.s32.totalorder %s22, 1
      %p66 = por %p64, %p65
      %p68 = scmp.ne.s32.totalorder %s53, %s67
      %p69 = scmp.eq.s32.totalorder %s22, 0
      %p70 = por %p68, %p69
      %s72 = sadd.s32 %s71, 1
      %p75 = scmp.eq.s32.totalorder %s16, 1
      %p76 = scmp.ne.s32.totalorder %s71, %s73
      %p77 = scmp.eq.s32.totalorder %s16, 0
      %p78 = por %p76, %p77
      %p79 = scmp.ne.s32.totalorder %s71, %s73
      %p80 = scmp.eq.s32.totalorder %s21, 1
      %p81 = por %p79, %p80
      %p82 = scmp.ne.s32.totalorder %s73, %s74
      %p83 = scmp.eq.s32.totalorder %s21, 0
      %p84 = por %p82, %p83
      %p85 = scmp.ne.s32.totalorder %s73, %s74
      %p86 = scmp.eq.s32.totalorder %s22, 1
      %p87 = por %p85, %p86
      %p89 = scmp.ne.s32.totalorder %s74, %s88
      %p90 = scmp.eq.s32.totalorder %s22, 0
      %p91 = por %p89, %p90
      %s92 = ssub.s32 %s16, %s23
      %p93 = scmp.eq.s32.totalorder %s92, 0
      %s95 = sadd.s32 %s94, 1
      %s96 = scalar_select %p93, %s94, %s95
      %p99 = pneg %p93
      %p100 = scmp.eq.s32.totalorder %s16, 1
      %p101 = por %p99, %p100
      %p102 = scmp.ne.s32.totalorder %s94, %s97
      %p103 = scmp.eq.s32.totalorder %s16, 0
      %p104 = por %p102, %p103
      %p105 = scmp.ne.s32.totalorder %s94, %s97
      %p106 = scmp.eq.s32.totalorder %s21, 1
      %p107 = por %p105, %p106
      %p108 = scmp.ne.s32.totalorder %s97, %s98
      %p109 = scmp.eq.s32.totalorder %s21, 0
      %p110 = por %p108, %p109
      %p111 = scmp.ne.s32.totalorder %s97, %s98
      %p112 = scmp.eq.s32.totalorder %s22, 1
      %p113 = por %p111, %p112
      %p115 = scmp.ne.s32.totalorder %s98, %s114
      %p116 = scmp.eq.s32.totalorder %s22, 0
      %p117 = por %p115, %p116
      %p118 = scmp.le.s32.totalorder 1, %s16
      %p119 = scmp.lt.s32.totalorder %s16, 3
      %p120 = pnand %p118, %p119
      %p121 = pneg %p120
      // Predicated region
      $region9: #{graph_convolution.1} parent=5 // pred_check
        _
      $region10: #{graph_convolution.1} parent=5 // pred_check_branch
        %123 = sbr.rel (%p120) target = $region12
      $region11: #{graph_convolution.1} parent=5 // pred_region
        %s124 = ssub.s32 %s16, 1
        // Predicated region
        $region13: #{graph_convolution.1} parent=11 // pred_check
          %p125 = pneg %p63
        $region14: #{graph_convolution.1} parent=11 // pred_check_branch
          %127 = sbr.rel (%p125) target = $region16
        $region15: #{graph_convolution.1} parent=11 // pred_region
          %129 = vsyncadd [#allocation6], 0
          %s130 = sshll.u32 %s1, 4
          %s131 = int_to_ptr.hbm [resolvable:$true] %s130
          %s132 = sshll.u32 [#allocation5], 4
          %s133 = int_to_ptr.vmem [resolvable:$true] %s132
          %138 = dma.hbm_to_vmem [thread:$0]  %s131, 256, %s133, [#allocation6], 128, 128, 8
        $region16: #{graph_convolution.1} parent=11 // pred_fallthru
          _
        // Predicated region
        $region17: #{graph_convolution.1} parent=11 // pred_check
          %p139 = pneg %p84
        $region18: #{graph_convolution.1} parent=11 // pred_check_branch
          %141 = sbr.rel (%p139) target = $region20
        $region19: #{graph_convolution.1} parent=11 // pred_region
          %143 = vsyncadd [#allocation6], 0
          %s144 = sshll.u32 %s2, 4
          %s145 = int_to_ptr.hbm [resolvable:$true] %s144
          %s146 = sshll.u32 [#allocation7], 4
          %s147 = int_to_ptr.vmem [resolvable:$true] %s146
          %152 = dma.hbm_to_vmem [thread:$0]  %s145, 512, %s147, [#allocation6], 128, 128, 8
        $region20: #{graph_convolution.1} parent=11 // pred_fallthru
          _
      $region12: #{graph_convolution.1} parent=5 // pred_fallthru
        _
      %p153 = scmp.lt.s32.totalorder %s16, 2
      // Predicated region
      $region21: #{graph_convolution.1} parent=5 // pred_check
        %p154 = pneg %p153
      $region22: #{graph_convolution.1} parent=5 // pred_check_branch
        %156 = sbr.rel (%p154) target = $region24
      $region23: #{graph_convolution.1} parent=5 // pred_region
        // Predicated region
        $region25: #{graph_convolution.1} parent=23 // pred_check
          %p157 = pneg %p36
        $region26: #{graph_convolution.1} parent=23 // pred_check_branch
          %159 = sbr.rel (%p157) target = $region28
        $region27: #{graph_convolution.1} parent=23 // pred_region
          %s160 = sand.u32 %s26, 1
          %s161 = scalar_lea.sflag [#allocation3], %s160
          %s162 = sand.u32 %s26, 1
          %s163 = smul.addr %s162, 16
          %s164 = scalar_lea.vmem [#allocation2], %s163
          %s165 = smul.u32 2, %s16
          %167 = vsyncadd %s161, 0
          %s168 = smul.addr %s165, 8
          %s169 = scalar_lea.hbm %s0, %s168
          %s170 = sshll.u32 %s169, 4
          %s171 = int_to_ptr.hbm [resolvable:$true] %s170
          %s172 = sshll.u32 %s164, 4
          %s173 = int_to_ptr.vmem [resolvable:$true] %s172
          %178 = dma.hbm_to_vmem [thread:$0]  %s171, 256, %s173, %s161, 128, 128, 8
        $region28: #{graph_convolution.1} parent=23 // pred_fallthru
          _
      $region24: #{graph_convolution.1} parent=5 // pred_fallthru
        _
      %p179 = scmp.le.s32.totalorder 1, %s16
      %p180 = scmp.lt.s32.totalorder %s16, 3
      %p181 = pnand %p179, %p180
      %p182 = pneg %p181
      // Predicated region
      $region29: #{graph_convolution.1} parent=5 // pred_check
        _
      $region30: #{graph_convolution.1} parent=5 // pred_check_branch
        %184 = sbr.rel (%p181) target = $region32
      $region31: #{graph_convolution.1} parent=5 // pred_region
        %s185 = ssub.s32 %s16, 1
        %s186 = sand.u32 %s29, 1
        %s187 = scalar_lea.sflag [#allocation3], %s186
        %s188 = sand.u32 %s29, 1
        %s189 = smul.addr %s188, 16
        %s190 = scalar_lea.vmem [#allocation2], %s189
        // Predicated region
        $region33: #{graph_convolution.1} parent=31 // pred_check
          %p191 = pneg %p42
        $region34: #{graph_convolution.1} parent=31 // pred_check_branch
          %193 = sbr.rel (%p191) target = $region36
        $region35: #{graph_convolution.1} parent=31 // pred_region
          %195 = dma.done %s187, 256
        $region36: #{graph_convolution.1} parent=31 // pred_fallthru
          _
        // Predicated region
        $region37: #{graph_convolution.1} parent=31 // pred_check
          %p196 = pneg %p63
        $region38: #{graph_convolution.1} parent=31 // pred_check_branch
          %198 = sbr.rel (%p196) target = $region40
        $region39: #{graph_convolution.1} parent=31 // pred_region
          %200 = dma.done [#allocation6], 256
        $region40: #{graph_convolution.1} parent=31 // pred_fallthru
          _
        // Predicated region
        $region41: #{graph_convolution.1} parent=31 // pred_check
          %p201 = pneg %p84
        $region42: #{graph_convolution.1} parent=31 // pred_check_branch
          %203 = sbr.rel (%p201) target = $region44
        $region43: #{graph_convolution.1} parent=31 // pred_region
          %205 = dma.done [#allocation6], 512
        $region44: #{graph_convolution.1} parent=31 // pred_fallthru
          _
        %s206 = sand.u32 %s29, 1
        %s207 = scalar_lea.sflag [#allocation3], %s206
        %s208 = sand.u32 %s29, 1
        %s209 = smul.addr %s208, 16
        %s210 = scalar_lea.vmem [#allocation2], %s209
        %p211 = pneg %p42
        %p212 = pneg %p39
        %p213 = pneg %p63
        %p214 = pneg %p60
        %p215 = pneg %p84
        %p216 = pneg %p81
        %p217 = pneg %p110
        %p218 = pneg %p107
        %s219 = sand.u32 %s97, 1
        %s220 = scalar_lea.sflag [#allocation4], %s219
        %s221 = sand.u32 %s97, 1
        %s222 = smul.addr %s221, 16
        %s223 = scalar_lea.vmem [#allocation8], %s222
        %s224 = smul.u32 2, %s21
        %s225 = smul.u32 2, %s21
        %v226 = vld [vmem:[#allocation5] sm:$0xff]
        %v227 = vld [vmem:[#allocation5 + $0x8] sm:$0xff]
        %v228 = vld [vmem:[%s190] sm:$0xff]
        %v229 = vld [vmem:[%s190 + $0x8] sm:$0xff]
        %vm230 = vcmask 130048
        %v232 = vsel %vm230, %v226, 0
        %v235 = vsel %vm230, %v227, 0
        %237 = vmatpush.msra.mxu0 0.0
        %238 = vmatpush.msra.mxu0 0.0
        %239 = vmatpush.msra.mxu0 0.0
        %240 = vmatpush.msra.mxu0 0.0
        %241 = vmatpush.msra.mxu0 0.0
        %242 = vmatpush.msra.mxu0 0.0
        %243 = vmatpush.msra.mxu0 0.0
        %244 = vmatpush.msra.mxu0 0.0
        %245 = vmatpush.msra.mxu0 0.0
        %246 = vmatpush.msra.mxu0 0.0
        %247 = vmatpush.msra.mxu0 0.0
        %248 = vmatpush.msra.mxu0 0.0
        %249 = vmatpush.msra.mxu0 0.0
        %250 = vmatpush.msra.mxu0 0.0
        %251 = vmatpush.msra.mxu0 %v229
        %252 = vmatpush.msra.mxu0 %v228
        %253 = vmatmul.f32.gmra.mxu0 %v232
        %v254 = vpop.f32.mrf.mxu0
        %v255 = vadd.f32 0.0, %v254
        %256 = vmatmul.f32.gmra.mxu0 %v235
        %v257 = vpop.f32.mrf.mxu0
        %v258 = vadd.f32 0.0, %v257
        %259 = vdwg.mxu0
        %v260 = vld [vmem:[#allocation7] sm:$0xff]
        %v261 = vld [vmem:[#allocation7 + $0x8] sm:$0xff]
        %v262 = vld [vmem:[#allocation7 + $0x10] sm:$0xff]
        %v263 = vld [vmem:[#allocation7 + $0x18] sm:$0xff]
        %vm264 = vcmask 261120
        %v266 = vsel %vm264, %v255, 0
        %v269 = vsel %vm264, %v258, 0
        %271 = vmatpush.msra.mxu0 0.0
        %272 = vmatpush.msra.mxu0 0.0
        %273 = vmatpush.msra.mxu0 0.0
        %274 = vmatpush.msra.mxu0 0.0
        %275 = vmatpush.msra.mxu0 0.0
        %276 = vmatpush.msra.mxu0 0.0
        %277 = vmatpush.msra.mxu0 0.0
        %278 = vmatpush.msra.mxu0 0.0
        %279 = vmatpush.msra.mxu0 0.0
        %280 = vmatpush.msra.mxu0 0.0
        %281 = vmatpush.msra.mxu0 0.0
        %282 = vmatpush.msra.mxu0 0.0
        %283 = vmatpush.msra.mxu0 %v263
        %284 = vmatpush.msra.mxu0 %v262
        %285 = vmatpush.msra.mxu0 %v261
        %286 = vmatpush.msra.mxu0 %v260
        %287 = vmatmul.f32.gmra.mxu0 %v266
        %v288 = vpop.f32.mrf.mxu0
        %v289 = vadd.f32 0.0, %v288
        %290 = vmatmul.f32.gmra.mxu0 %v269
        %v291 = vpop.f32.mrf.mxu0
        %v292 = vadd.f32 0.0, %v291
        %293 = vdwg.mxu0
        %294 = vst.msk [vmem:[%s223] sm:$0xff] %vm264, %v289
        %295 = vst.msk [vmem:[%s223 + $0x8] sm:$0xff] %vm264, %v292
        %s296 = sand.u32 %s97, 1
        %s297 = scalar_lea.sflag [#allocation4], %s296
        %s298 = sand.u32 %s97, 1
        %s299 = smul.addr %s298, 16
        %s300 = scalar_lea.vmem [#allocation8], %s299
        // Predicated region
        $region45: #{graph_convolution.1} parent=31 // pred_check
          %p301 = pneg %p107
        $region46: #{graph_convolution.1} parent=31 // pred_check_branch
          %303 = sbr.rel (%p301) target = $region48
        $region47: #{graph_convolution.1} parent=31 // pred_region
          %s304 = smul.u32 2, %s21
          %306 = vsyncadd %s297, 0
          %s307 = smul.addr %s304, 8
          %s308 = scalar_lea.hbm %s3, %s307
          %s309 = sshll.u32 %s300, 4
          %s310 = int_to_ptr.vmem [resolvable:$true] %s309
          %s311 = sshll.u32 %s308, 4
          %s312 = int_to_ptr.hbm [resolvable:$true] %s311
          %317 = dma.vmem_to_hbm [thread:$0]  %s310, 256, %s312, %s297, 128, 128, 8
        $region48: #{graph_convolution.1} parent=31 // pred_fallthru
          _
      $region32: #{graph_convolution.1} parent=5 // pred_fallthru
        _
      %p318 = scmp.le.s32.totalorder 2, %s16
      // Predicated region
      $region49: #{graph_convolution.1} parent=5 // pred_check
        %p319 = pneg %p318
      $region50: #{graph_convolution.1} parent=5 // pred_check_branch
        %321 = sbr.rel (%p319) target = $region52
      $region51: #{graph_convolution.1} parent=5 // pred_region
        %s322 = ssub.s32 %s16, 2
        // Predicated region
        $region53: #{graph_convolution.1} parent=51 // pred_check
          %p323 = pneg %p113
        $region54: #{graph_convolution.1} parent=51 // pred_check_branch
          %325 = sbr.rel (%p323) target = $region56
        $region55: #{graph_convolution.1} parent=51 // pred_region
          %s326 = sand.u32 %s98, 1
          %s327 = scalar_lea.sflag [#allocation4], %s326
          %s328 = sand.u32 %s98, 1
          %s329 = smul.addr %s328, 16
          %s330 = scalar_lea.vmem [#allocation8], %s329
          %332 = dma.done %s327, 256
        $region56: #{graph_convolution.1} parent=51 // pred_fallthru
          _
      $region52: #{graph_convolution.1} parent=5 // pred_fallthru
        _
    $region6: #{graph_convolution.1} parent=1 // loop_footer
      %s20 = sadd.s32 1, %s16
    $region7: #{graph_convolution.1} parent=1 // loop_footer_branch
      %15 = sbr.rel target = $region3
    $region8: #{graph_convolution.1} parent=1 // loop_exit
      _
    %333 = vsyncpa [#allocation3], 1
    %s334 = scalar_lea.sflag [#allocation3], 1
    %335 = vsyncpa %s334, 1
    %336 = vsyncpa [#allocation6], 1
    %337 = vsyncpa [#allocation4], 1
    %s338 = scalar_lea.sflag [#allocation4], 1
    %339 = vsyncpa %s338, 1

</llo_original>
